<compile_context>
chip_gen: v6e
topology: v6e:2x2x1
jax: 0.10.0
libtpu: 0.0.40
codegen_flags: <defaults>
</compile_context>

<pallas_src>
import math
import functools

import jax
import jax.numpy as jnp
from jax.experimental import pallas as pl
from jax.experimental.pallas import tpu as pltpu


# ---------------------------------------------------------------------------
# Kernels
# ---------------------------------------------------------------------------
def _mixed_linear_kernel_f32_out(b_ref, x_ref, w_ref, o_ref):
    """Grid step of y = x @ W (+ b) accumulating directly into an f32 output tile."""
    k = pl.program_id(2)

    @pl.when(k == 0)
    def _():
        if b_ref is not None:
            # Fold the bias into the accumulator init (broadcast (1, tn) -> (tm, tn)).
            o_ref[...] = jnp.broadcast_to(b_ref[...], o_ref.shape)
        else:
            o_ref[...] = jnp.zeros_like(o_ref)

    o_ref[...] += jnp.dot(x_ref[...], w_ref[...], preferred_element_type=jnp.float32)


def _mixed_linear_kernel_acc(b_ref, x_ref, w_ref, o_ref, acc_ref):
    """Grid step with an f32 VMEM accumulator; cast to o_ref.dtype on the last k."""
    k = pl.program_id(2)

    @pl.when(k == 0)
    def _():
        if b_ref is not None:
            acc_ref[...] = jnp.broadcast_to(b_ref[...], acc_ref.shape)
        else:
            acc_ref[...] = jnp.zeros_like(acc_ref)

    acc_ref[...] += jnp.dot(x_ref[...], w_ref[...], preferred_element_type=jnp.float32)

    @pl.when(k == pl.num_programs(2) - 1)
    def _():
        o_ref[...] = acc_ref[...].astype(o_ref.dtype)


# ---------------------------------------------------------------------------
# Tile selection (VMEM-budget driven)
# ---------------------------------------------------------------------------
def _round_up(a, b):
    return (a + b - 1) // b * b


def _sublane_align(itemsize):
    # Packed sub-32-bit dtypes want 16 (bf16) / 32 (int8,fp8) sublane multiples.
    return {4: 8, 2: 16, 1: 32}.get(int(itemsize), 8)


def _balanced_tile(dim, cap, align):
    """Largest tile <= ~cap that keeps padding low and respects alignment."""
    if dim <= cap:
        return _round_up(dim, align)
    nblocks = -(-dim // cap)  # ceil
    return _round_up(-(-dim // nblocks), align)


def _vmem_footprint(tm, tn, tk, in_bytes, out_bytes, use_acc, has_bias):
    f = 2 * (tm * tk + tk * tn) * in_bytes   # double-buffered x and W tiles
    f += 2 * tm * tn * out_bytes             # double-buffered output tile
    if has_bias:
        f += 2 * tn * 4                      # bias tile (f32)
    if use_acc:
        f += tm * tn * 4                     # f32 accumulator scratch
    return f


def _choose_tiles(M, N, K, in_bytes, out_bytes, use_acc, has_bias, budget_bytes):
    # Prioritize tm (cuts W re-streaming: total W traffic is (M/tm)*K*N*bytes),
    # then tn; tk large to amortize per-grid-step overhead and the k==0 init.
    m_align = max(_sublane_align(in_bytes), _sublane_align(out_bytes))
    tk_cap = 2048 if in_bytes <= 2 else 1024
    tm = _balanced_tile(M, 1024, m_align)
    tn = _balanced_tile(N, 512, 128)
    tk = _balanced_tile(K, tk_cap, 128)

    def fits(a, b, c):
        return _vmem_footprint(a, b, c, in_bytes, out_bytes, use_acc, has_bias) <= budget_bytes

    while not fits(tm, tn, tk) and tk > 512:
        tk = _round_up(tk // 2, 128)
    while not fits(tm, tn, tk) and tn > 256:
        tn = _round_up(tn // 2, 128)
    while not fits(tm, tn, tk) and tm > 256:
        tm = _round_up(tm // 2, m_align)
    return tm, tn, tk


# ---------------------------------------------------------------------------
# Public wrapper
# ---------------------------------------------------------------------------
def mixed_linear(x, weight, bias=None, *, compute_dtype=jnp.bfloat16, out_dtype=None,
                 tm=None, tn=None, tk=None, vmem_budget_bytes=40 * 1024 * 1024):
    """y = x @ weight (+ bias), equivalent to torch.addmm(bias, x, weight).

    Operands are cast to `compute_dtype` (default bf16, MXU-native); accumulation is
    always f32. Pass compute_dtype=jnp.float32 for bit-accurate f32 semantics.
    """
    # TODO(synk): sparse-input paths (torch.sparse.mm / torch.sparse.addmm) have no
    # Pallas equivalent here; only the dense forward is implemented.
    M, K = x.shape
    K2, N = weight.shape
    assert K == K2, f"in_features mismatch: {K} vs {K2}"

    out_dtype = jnp.dtype(out_dtype or x.dtype)
    compute_dtype = jnp.dtype(compute_dtype or x.dtype)
    in_bytes = compute_dtype.itemsize
    out_bytes = out_dtype.itemsize
    out_is_f32 = out_dtype == jnp.dtype(jnp.float32)
    use_acc = not out_is_f32
    has_bias = bias is not None

    # --- tiles + padding -----------------------------------------------------
    tm_d, tn_d, tk_d = _choose_tiles(M, N, K, in_bytes, out_bytes, use_acc, has_bias,
                                     vmem_budget_bytes)
    tm = tm or tm_d
    tn = tn or tn_d
    tk = tk or tk_d

    Mp, Np, Kp = _round_up(M, tm), _round_up(N, tn), _round_up(K, tk)

    xp = x.astype(compute_dtype)
    if (Mp, Kp) != (M, K):
        xp = jnp.pad(xp, ((0, Mp - M), (0, Kp - K)))
    wp = weight.astype(compute_dtype)
    if (Kp, Np) != (K, N):
        wp = jnp.pad(wp, ((0, Kp - K), (0, Np - N)))

    grid = (Mp // tm, Np // tn, Kp // tk)

    x_spec = pl.BlockSpec((tm, tk), lambda i, j, k: (i, k))
    w_spec = pl.BlockSpec((tk, tn), lambda i, j, k: (k, j))
    o_spec = pl.BlockSpec((tm, tn), lambda i, j, k: (i, j))

    kernel_fn = _mixed_linear_kernel_f32_out if out_is_f32 else _mixed_linear_kernel_acc

    if has_bias:
        bp = bias.astype(jnp.float32).reshape(1, N)
        if Np != N:
            bp = jnp.pad(bp, ((0, 0), (0, Np - N)))
        in_arrays = (bp, xp, wp)
        in_specs = [pl.BlockSpec((1, tn), lambda i, j, k: (0, j)), x_spec, w_spec]
        kernel = kernel_fn
    else:
        in_arrays = (xp, wp)
        in_specs = [x_spec, w_spec]
        kernel = functools.partial(kernel_fn, None)

    scratch_shapes = [] if out_is_f32 else [pltpu.VMEM((tm, tn), jnp.float32)]

    footprint = _vmem_footprint(tm, tn, tk, in_bytes, out_bytes, use_acc, has_bias)
    # >= 32 MiB (above all scoped defaults), capped at 48 MiB (safe on v7x's 64 MiB).
    vmem_limit = int(min(max(int(footprint * 1.5) + (4 << 20), 32 << 20), 48 << 20))

    cost = pl.CostEstimate(
        flops=2 * Mp * Np * Kp,
        transcendentals=0,
        bytes_accessed=(Mp * Kp + Kp * Np) * in_bytes + Mp * Np * out_bytes,
    )

    out_padded = pl.pallas_call(
        kernel,
        out_shape=jax.ShapeDtypeStruct((Mp, Np), out_dtype),
        grid_spec=pltpu.PrefetchScalarGridSpec(
            num_scalar_prefetch=0,
            grid=grid,
            in_specs=in_specs,
            out_specs=o_spec,
            scratch_shapes=scratch_shapes,
        ),
        compiler_params=pltpu.CompilerParams(
            dimension_semantics=("parallel", "parallel", "arbitrary"),
            vmem_limit_bytes=vmem_limit,
        ),
        cost_estimate=cost,
    )(*in_arrays)

    if (Mp, Np) != (M, N):
        out_padded = out_padded[:M, :N]
    return out_padded


# ---------------------------------------------------------------------------
# Parameter init mirroring MixedLinear.reset_parameters()
# ---------------------------------------------------------------------------
def init_mixed_linear_params(key, in_features, out_features, bias=True,
                             dtype=jnp.float32):
    """kaiming_uniform_(mode='fan_out', a=sqrt(5)) on (in, out); bias U(-1/sqrt(fo), ...)."""
    kw, kb = jax.random.split(key)
    bound_w = 1.0 / math.sqrt(out_features)
    weight = jax.random.uniform(
        kw, (in_features, out_features), dtype, minval=-bound_w, maxval=bound_w)
    if bias:
        bound_b = 1.0 / math.sqrt(out_features)
        b = jax.random.uniform(
            kb, (out_features,), dtype, minval=-bound_b, maxval=bound_b)
    else:
        b = None
    return weight, b


if __name__ == "__main__":
    # Small shapes consistent with the module: batch=8, in_features=32, out_features=64.
    M, in_features, out_features = 8, 32, 64

    key = jax.random.PRNGKey(0)
    kx, kp = jax.random.split(key)
    x = jax.random.normal(kx, (M, in_features), jnp.float32)
    weight, bias = init_mixed_linear_params(kp, in_features, out_features, bias=True)

    y_ref = x @ weight + bias

    # 1) Default fast path: bf16 operands, f32 accumulation, f32 output (direct acc).
    y = jax.block_until_ready(mixed_linear(x, weight, bias))
    assert y.shape == (M, out_features)
    assert jnp.allclose(y, y_ref, atol=1e-1, rtol=5e-2), "bf16 path mismatch"

    # 2) Full-f32 path on non-multiple shapes: exercises padding + tight addmm match.
    M2, K2, N2 = 20, 100, 200
    x2 = jax.random.normal(jax.random.PRNGKey(1), (M2, K2), jnp.float32)
    w2 = jax.random.normal(jax.random.PRNGKey(2), (K2, N2), jnp.float32) * 0.1
    b2 = jax.random.normal(jax.random.PRNGKey(3), (N2,), jnp.float32) * 0.1
    y2 = jax.block_until_ready(mixed_linear(x2, w2, b2, compute_dtype=jnp.float32))
    assert jnp.allclose(y2, x2 @ w2 + b2, atol=1e-4, rtol=1e-4), "padded f32 mismatch"

    # 3) bias=None + bf16 output: exercises the no-bias partial and the f32-acc-scratch
    #    kernel variant (torch: input.matmul(self.weight)).
    y_nb = jax.block_until_ready(mixed_linear(x, weight, None, out_dtype=jnp.bfloat16))
    assert jnp.allclose(y_nb.astype(jnp.float32), x @ weight, atol=1e-1, rtol=5e-2), \
        "no-bias/bf16-out mismatch"

    print("KERNEL_OK")
</pallas_src>

<mosaic_0001>
module attributes {stable_mosaic.version = 11 : i64} {
  func.func @_mixed_linear_kernel_f32_out(%arg0: i32, %arg1: i32, %arg2: i32, %arg3: memref<1x128xf32, #tpu.memory_space<vmem>>, %arg4: memref<16x128xbf16, #tpu.memory_space<vmem>>, %arg5: memref<128x128xbf16, #tpu.memory_space<vmem>>, %arg6: memref<16x128xf32, #tpu.memory_space<vmem>>) attributes {dimension_semantics = [#tpu.dimension_semantics<parallel>, #tpu.dimension_semantics<parallel>, #tpu.dimension_semantics<arbitrary>], iteration_bounds = array<i64: 1, 1, 1>, scalar_prefetch = 0 : i64, scratch_operands = 0 : i64, tpu.core_type = #tpu.core_type<tc>, window_params = [{transform_indices = @transform_0, window_bounds = array<i64: 1, 128>}, {transform_indices = @transform_1, window_bounds = array<i64: 16, 128>}, {transform_indices = @transform_2, window_bounds = array<i64: 128, 128>}, {transform_indices = @transform_3, window_bounds = array<i64: 16, 128>}]} {
    %c0_i32 = arith.constant 0 : i32
    %0 = arith.cmpi eq, %arg2, %c0_i32 : i32
    %1 = arith.extui %0 : i1 to i32
    %c0_i32_0 = arith.constant 0 : i32
    %2 = arith.cmpi ne, %1, %c0_i32_0 : i32
    scf.if %2 {
      %c0_8 = arith.constant 0 : index
      %c0_9 = arith.constant 0 : index
      %9 = vector.load %arg3[%c0_8, %c0_9] : memref<1x128xf32, #tpu.memory_space<vmem>>, vector<1x128xf32>
      %10 = vector.shape_cast %9 : vector<1x128xf32> to vector<1x128xf32>
      %11 = vector.broadcast %10 : vector<1x128xf32> to vector<16x128xf32>
      %c0_10 = arith.constant 0 : index
      %c0_11 = arith.constant 0 : index
      %12 = vector.load %arg6[%c0_10, %c0_11] : memref<16x128xf32, #tpu.memory_space<vmem>>, vector<16x128xf32>
      tpu.vector_store %arg6[%c0_10, %c0_11], %11 {strides = array<i32>} : memref<16x128xf32, #tpu.memory_space<vmem>>, vector<16x128xf32>,
    } else {
    }
    %c0 = arith.constant 0 : index
    %c0_1 = arith.constant 0 : index
    %3 = vector.load %arg6[%c0, %c0_1] : memref<16x128xf32, #tpu.memory_space<vmem>>, vector<16x128xf32>
    %c0_2 = arith.constant 0 : index
    %c0_3 = arith.constant 0 : index
    %4 = vector.load %arg4[%c0_2, %c0_3] : memref<16x128xbf16, #tpu.memory_space<vmem>>, vector<16x128xbf16>
    %c0_4 = arith.constant 0 : index
    %c0_5 = arith.constant 0 : index
    %5 = vector.load %arg5[%c0_4, %c0_5] : memref<128x128xbf16, #tpu.memory_space<vmem>>, vector<128x128xbf16>
    %cst = arith.constant dense<0.000000e+00> : vector<16x128xf32>
    %6 = tpu.matmul %4, %5, %cst {dimension_numbers = #tpu.dot_dimension_numbers<[1], [0], [0], [1], [0, 0, 1, 1], [], []>} : vector<16x128xbf16>, vector<128x128xbf16>, vector<16x128xf32> -> vector<16x128xf32>
    %7 = arith.addf %3, %6 : vector<16x128xf32>
    %c0_6 = arith.constant 0 : index
    %c0_7 = arith.constant 0 : index
    %8 = vector.load %arg6[%c0_6, %c0_7] : memref<16x128xf32, #tpu.memory_space<vmem>>, vector<16x128xf32>
    tpu.vector_store %arg6[%c0_6, %c0_7], %7 {strides = array<i32>} : memref<16x128xf32, #tpu.memory_space<vmem>>, vector<16x128xf32>,
    return
  }
  func.func @transform_0(%arg0: i32, %arg1: i32, %arg2: i32) -> (i32, i32) {
    %c0_i32 = arith.constant 0 : i32
    %c0_i32_0 = arith.constant 0 : i32
    return %c0_i32, %arg1 : i32, i32
  }
  func.func @transform_1(%arg0: i32, %arg1: i32, %arg2: i32) -> (i32, i32) {
    %c0_i32 = arith.constant 0 : i32
    return %arg0, %arg2 : i32, i32
  }
  func.func @transform_2(%arg0: i32, %arg1: i32, %arg2: i32) -> (i32, i32) {
    %c0_i32 = arith.constant 0 : i32
    return %arg2, %arg1 : i32, i32
  }
  func.func @transform_3(%arg0: i32, %arg1: i32, %arg2: i32) -> (i32, i32) {
    %c0_i32 = arith.constant 0 : i32
    return %arg0, %arg1 : i32, i32
  }
}

</mosaic_0001>

<llo_original>
// kernel: tpu_custom_call.1
$region0: #{tpu_custom_call.1}
  #allocation0 [shape = 'u32[]', space=smem, size = 0x4, offset = 0x4, fixed_abs, tag = 'smem constant byte address 0x4 - core index']
  #allocation1 [shape = 'u32[144,128]{1,0:T(1,128)}', space=vmem, size = 0x12000, scoped, tag = 'internal scratch']
  %s0 = inlined_call_operand.hbm [shape: f32[1,128], index: 0, kind: input, shape index: {}]
  %s1 = inlined_call_operand.hbm [shape: bf16[16,128], index: 1, kind: input, shape index: {}]
  %s2 = inlined_call_operand.hbm [shape: bf16[128,128], index: 2, kind: input, shape index: {}]
  %s3 = inlined_call_operand.hbm [shape: f32[16,128], index: 3, kind: output, shape index: {}]
  %s4 = sld [smem:[#allocation0]]
  $region38: #{tpu_custom_call.1} parent=0
    _
  %s6 = ssub.s32 1, %s4
  %s7 = scalar_select 0, %s6, %s4
  $region1: #{tpu_custom_call.1} parent=0
    #allocation2 [shape = 'u8[512]{0}', space=vmem, size = 0x400, scoped, tag = 'input window, operand 0, single buffered']
    #allocation3 [shape = 's32[1]{0}', space=sflag, size = 0x4, scoped, tag = 'scoped memory for tpu_custom_call.1']
    #allocation4 [shape = 's32[1]{0}', space=sflag, size = 0x4, scoped, tag = 'scoped memory for tpu_custom_call.1']
    #allocation5 [shape = 'u8[4096]{0}', space=vmem, size = 0x1000, scoped, tag = 'input window, operand 1, single buffered']
    #allocation6 [shape = 's32[1]{0}', space=sflag, size = 0x4, scoped, tag = 'scoped memory for tpu_custom_call.1']
    #allocation7 [shape = 'u8[32768]{0}', space=vmem, size = 0x8000, scoped, tag = 'input window, operand 2, single buffered']
    #allocation8 [shape = 'u8[8192]{0}', space=vmem, size = 0x2000, scoped, tag = 'output window, operand 0, single buffered']
    %8 = vsyncpa [#allocation3], 0
    %9 = vsyncpa [#allocation6], 0
    %10 = vsyncpa [#allocation4], 0
    // Predicated region
    $region2: #{tpu_custom_call.1} parent=1 // pred_check
      _
    $region3: #{tpu_custom_call.1} parent=1 // pred_check_branch
      %12 = sbr.rel (0) target = $region5
    $region4: #{tpu_custom_call.1} parent=1 // pred_region
      %s14 = ssub.s32 16, 16
      %15 = vsyncadd [#allocation3], %s14
      %s17 = sshll.u32 [#allocation2], 4
      %s18 = int_to_ptr.vmem [resolvable:$true] %s17
      %20 = dma.hbm_to_vmem [thread:$0]  %s0, 16, %s18, [#allocation3]
    $region5: #{tpu_custom_call.1} parent=1 // pred_fallthru
      _
    // Predicated region
    $region6: #{tpu_custom_call.1} parent=1 // pred_check
      _
    $region7: #{tpu_custom_call.1} parent=1 // pred_check_branch
      %22 = sbr.rel (0) target = $region9
    $region8: #{tpu_custom_call.1} parent=1 // pred_region
      %s24 = ssub.s32 128, 128
      %25 = vsyncadd [#allocation6], %s24
      %s26 = sshll.u32 [#allocation5], 4
      %s27 = int_to_ptr.vmem [resolvable:$true] %s26
      %32 = dma.hbm_to_vmem [thread:$0]  %s1, 128, %s27, [#allocation6], 64, 64, 4
    $region9: #{tpu_custom_call.1} parent=1 // pred_fallthru
      _
    // Predicated region
    $region10: #{tpu_custom_call.1} parent=1 // pred_check
      _
    $region11: #{tpu_custom_call.1} parent=1 // pred_check_branch
      %34 = sbr.rel (0) target = $region13
    $region12: #{tpu_custom_call.1} parent=1 // pred_region
      %s36 = ssub.s32 1024, 1024
      %37 = vsyncadd [#allocation6], %s36
      %s38 = sshll.u32 [#allocation7], 4
      %s39 = int_to_ptr.vmem [resolvable:$true] %s38
      %44 = dma.hbm_to_vmem [thread:$0]  %s2, 1024, %s39, [#allocation6], 64, 64, 4
    $region13: #{tpu_custom_call.1} parent=1 // pred_fallthru
      _
    // Predicated region
    $region14: #{tpu_custom_call.1} parent=1 // pred_check
      _
    $region15: #{tpu_custom_call.1} parent=1 // pred_check_branch
      %46 = sbr.rel (0) target = $region17
    $region16: #{tpu_custom_call.1} parent=1 // pred_region
      %47 = dma.done [#allocation3], 16
    $region17: #{tpu_custom_call.1} parent=1 // pred_fallthru
      _
    // Predicated region
    $region18: #{tpu_custom_call.1} parent=1 // pred_check
      _
    $region19: #{tpu_custom_call.1} parent=1 // pred_check_branch
      %49 = sbr.rel (0) target = $region21
    $region20: #{tpu_custom_call.1} parent=1 // pred_region
      %50 = dma.done [#allocation6], 128
    $region21: #{tpu_custom_call.1} parent=1 // pred_fallthru
      _
    // Predicated region
    $region22: #{tpu_custom_call.1} parent=1 // pred_check
      _
    $region23: #{tpu_custom_call.1} parent=1 // pred_check_branch
      %52 = sbr.rel (0) target = $region25
    $region24: #{tpu_custom_call.1} parent=1 // pred_region
      %53 = dma.done [#allocation6], 1024
    $region25: #{tpu_custom_call.1} parent=1 // pred_fallthru
      _
    %p55 = scmp.eq.s32.totalorder 0, 0
    // Predicated region
    $region26: #{tpu_custom_call.1} parent=1 // pred_check
      %p56 = pneg %p55
    $region27: #{tpu_custom_call.1} parent=1 // pred_check_branch
      %58 = sbr.rel (%p56) target = $region29
    $region28: #{tpu_custom_call.1} parent=1 // pred_region
      %v59 = vld [vmem:[#allocation2] sm:$0x1]
      %v61 = vlaneseq
      %v62 = vshrl.u32 %v61, 7
      %v63 = vsub.s32 0, %v62
      %v64 = vrot.slane %v59, %v63
      %66 = vst [vmem:[#allocation8] sm:$0xff] %v64
      %67 = vst [vmem:[#allocation8 + $0x8] sm:$0xff] %v64
    $region29: #{tpu_custom_call.1} parent=1 // pred_fallthru
      _
    %v68 = vld [vmem:[#allocation8] sm:$0xff]
    %v69 = vld [vmem:[#allocation8 + $0x8] sm:$0xff]
    %v70 = vld [vmem:[#allocation5] sm:$0xf]
    %v71 = vld [vmem:[#allocation5 + $0x4] sm:$0xf]
    %v72 = vld [vmem:[#allocation7] sm:$0xf]
    %v73 = vld [vmem:[#allocation7 + $0x4] sm:$0xf]
    %v74 = vld [vmem:[#allocation7 + $0x8] sm:$0xf]
    %v75 = vld [vmem:[#allocation7 + $0xc] sm:$0xf]
    %v76 = vld [vmem:[#allocation7 + $0x10] sm:$0xf]
    %v77 = vld [vmem:[#allocation7 + $0x14] sm:$0xf]
    %v78 = vld [vmem:[#allocation7 + $0x18] sm:$0xf]
    %v79 = vld [vmem:[#allocation7 + $0x1c] sm:$0xf]
    %v80 = vld [vmem:[#allocation7 + $0x20] sm:$0xf]
    %v81 = vld [vmem:[#allocation7 + $0x24] sm:$0xf]
    %v82 = vld [vmem:[#allocation7 + $0x28] sm:$0xf]
    %v83 = vld [vmem:[#allocation7 + $0x2c] sm:$0xf]
    %v84 = vld [vmem:[#allocation7 + $0x30] sm:$0xf]
    %v85 = vld [vmem:[#allocation7 + $0x34] sm:$0xf]
    %v86 = vld [vmem:[#allocation7 + $0x38] sm:$0xf]
    %v87 = vld [vmem:[#allocation7 + $0x3c] sm:$0xf]
    %v90 = vunpack.c.l.b16 %v70
    %v91 = vunpack.c.l.b16 %v71
    %v92 = vpack.c.b16 %v91, %v90
    %v110 = vunpack.c.l.b16 %v72
    %v111 = vunpack.c.l.b16 %v73
    %v112 = vunpack.c.l.b16 %v74
    %v113 = vunpack.c.l.b16 %v75
    %v114 = vunpack.c.l.b16 %v76
    %v115 = vunpack.c.l.b16 %v77
    %v116 = vunpack.c.l.b16 %v78
    %v117 = vunpack.c.l.b16 %v79
    %v118 = vunpack.c.l.b16 %v80
    %v119 = vunpack.c.l.b16 %v81
    %v120 = vunpack.c.l.b16 %v82
    %v121 = vunpack.c.l.b16 %v83
    %v122 = vunpack.c.l.b16 %v84
    %v123 = vunpack.c.l.b16 %v85
    %v124 = vunpack.c.l.b16 %v86
    %v125 = vunpack.c.l.b16 %v87
    %v126 = vpack.c.b16 %v111, %v110
    %v127 = vpack.c.b16 %v113, %v112
    %v128 = vpack.c.b16 %v115, %v114
    %v129 = vpack.c.b16 %v117, %v116
    %v130 = vpack.c.b16 %v119, %v118
    %v131 = vpack.c.b16 %v121, %v120
    %v132 = vpack.c.b16 %v123, %v122
    %v133 = vpack.c.b16 %v125, %v124
    %142 = vmatprep.subr.bf16.mxu0 0
    %143 = vmatpush1.bf16.msra.mxu0 %v133
    %144 = vmatprep.subr.bf16.mxu0 0
    %145 = vmatpush1.bf16.msra.mxu0 %v132
    %146 = vmatprep.subr.bf16.mxu0 0
    %147 = vmatpush1.bf16.msra.mxu0 %v131
    %148 = vmatprep.subr.bf16.mxu0 0
    %149 = vmatpush1.bf16.msra.mxu0 %v130
    %150 = vmatprep.subr.bf16.mxu0 0
    %151 = vmatpush1.bf16.msra.mxu0 %v129
    %152 = vmatprep.subr.bf16.mxu0 0
    %153 = vmatpush1.bf16.msra.mxu0 %v128
    %154 = vmatprep.subr.bf16.mxu0 0
    %155 = vmatpush1.bf16.msra.mxu0 %v127
    %156 = vmatprep.subr.bf16.mxu0 0
    %157 = vmatpush1.bf16.msra.mxu0 %v126
    %158 = vmatprep.subr.bf16.mxu0 0
    %159 = vmatpush2.bf16.msra.mxu0 0
    %160 = vmatprep.subr.bf16.mxu0 0
    %161 = vmatpush2.bf16.msra.mxu0 0
    %162 = vmatprep.subr.bf16.mxu0 0
    %163 = vmatpush2.bf16.msra.mxu0 0
    %164 = vmatprep.subr.bf16.mxu0 0
    %165 = vmatpush2.bf16.msra.mxu0 0
    %166 = vmatprep.subr.bf16.mxu0 0
    %167 = vmatpush2.bf16.msra.mxu0 0
    %168 = vmatprep.subr.bf16.mxu0 0
    %169 = vmatpush2.bf16.msra.mxu0 0
    %170 = vmatprep.subr.bf16.mxu0 0
    %171 = vmatpush2.bf16.msra.mxu0 0
    %172 = vmatprep.subr.bf16.mxu0 0
    %173 = vmatpush2.bf16.msra.mxu0 0
    %174 = vmatprep.mubr.bf16.mxu0 0
    %175 = vmatmul.mubr.bf16.gmra.mxu0 %v92
    %v176 = vpop.f32.mrf.mxu0
    %v177 = vadd.f32 0.0, %v176
    %v178 = vpop.f32.mrf.mxu0
    %v179 = vpop.f32.mrf.mxu0
    %v180 = vadd.f32 0.0, %v179
    %v181 = vpop.f32.mrf.mxu0
    %182 = vdwg.mxu0
    %v183 = vadd.f32 %v68, %v177
    %v184 = vadd.f32 %v69, %v180
    %185 = vst [vmem:[#allocation8] sm:$0xff] %v183
    %186 = vst [vmem:[#allocation8 + $0x8] sm:$0xff] %v184
    // Predicated region
    $region30: #{tpu_custom_call.1} parent=1 // pred_check
      _
    $region31: #{tpu_custom_call.1} parent=1 // pred_check_branch
      %188 = sbr.rel (0) target = $region33
    $region32: #{tpu_custom_call.1} parent=1 // pred_region
      %s190 = ssub.s32 256, 256
      %191 = vsyncadd [#allocation4], %s190
      %s192 = sshll.u32 [#allocation8], 4
      %s193 = int_to_ptr.vmem [resolvable:$true] %s192
      %198 = dma.vmem_to_hbm [thread:$0]  %s193, 256, %s3, [#allocation4], 128, 128, 8
    $region33: #{tpu_custom_call.1} parent=1 // pred_fallthru
      _
    // Predicated region
    $region34: #{tpu_custom_call.1} parent=1 // pred_check
      _
    $region35: #{tpu_custom_call.1} parent=1 // pred_check_branch
      %200 = sbr.rel (0) target = $region37
    $region36: #{tpu_custom_call.1} parent=1 // pred_region
      %201 = dma.done [#allocation4], 256
    $region37: #{tpu_custom_call.1} parent=1 // pred_fallthru
      _
    %202 = vsyncpa [#allocation3], 1
    %203 = vsyncpa [#allocation6], 1
    %204 = vsyncpa [#allocation4], 1

</llo_original>
